<compile_context>
chip_gen: v7x
topology: tpu7x:2x2x1
jax: 0.10.0
libtpu: 0.0.40
codegen_flags: <defaults>
</compile_context>

<pallas_src>
import jax
import jax.numpy as jnp
from jax.experimental import pallas as pl
from jax.experimental.pallas import tpu as pltpu

# Logical layer sizes (match the PyTorch module).
D_IN, D_H1, D_H2, D_OUT = 3, 106, 212, 3
# Tile-aligned padded sizes presented to the kernel.
P_IN, P_H1, P_H2, P_OUT_ROWS = 8, 128, 256, 8


def _round_up(n, m):
    return ((n + m - 1) // m) * m


def _mlp_kernel(x_ref, w1_ref, b1_ref, w2_ref, b2_ref, w3t_ref, b3_ref, o_ref):
    x = x_ref[...]                                   # (BLK, 3)   f32
    w1 = w1_ref[...]                                 # (8, 128)   f32, rows >= 3 are zero

    # ---- Layer 1: Linear(3, 106) + ReLU.  K=3 -> three VPU broadcast-FMAs
    # (different VLIW slot than the MXU; avoids a K-padded-to-128 matmul).
    # Bias-add + ReLU in f32 vregs, then materialize h1 in bf16 for the MXU.
    h1f = (x[:, 0:1] * w1[0:1, :]
           + x[:, 1:2] * w1[1:2, :]
           + x[:, 2:3] * w1[2:3, :]
           + b1_ref[...])
    h1 = jnp.maximum(h1f, 0.0).astype(jnp.bfloat16)  # (BLK, 128) bf16, lanes >= 106 zero

    # ---- Layer 2: Linear(106, 212) + ReLU.  MXU, bf16 inputs, f32 accumulate.
    h2 = jnp.dot(h1, w2_ref[...],
                 preferred_element_type=jnp.float32) + b2_ref[...]
    h2 = jnp.maximum(h2, 0.0)                        # (BLK, 256) f32, lanes >= 212 zero

    # ---- Layer 3: Linear(212, 3) on VPU + XLU (no MXU pushes).
    # w3t rows are lane-dense copies of w3's output columns (f32).
    w3t = w3t_ref[...]                               # (8, 256) f32, rows >= 3 zero
    o0 = jnp.sum(h2 * w3t[0:1, :], axis=-1, keepdims=True)   # (BLK, 1)
    o1 = jnp.sum(h2 * w3t[1:2, :], axis=-1, keepdims=True)
    o2 = jnp.sum(h2 * w3t[2:3, :], axis=-1, keepdims=True)
    out = jnp.concatenate([o0, o1, o2], axis=-1) + b3_ref[...]  # (BLK, 3)
    o_ref[...] = out.astype(o_ref.dtype)


def _pad_params(params):
    """Zero-pad weights/biases to tile-aligned shapes; only w2 (MXU) -> bf16."""
    def pad2(a, rows, cols, dtype):
        out = jnp.zeros((rows, cols), dtype)
        return out.at[: a.shape[0], : a.shape[1]].set(a.astype(dtype))

    return {
        "w1":  pad2(params["w1"], P_IN, P_H1, jnp.float32),    # (8, 128)   VPU operand
        "b1":  pad2(params["b1"], 1, P_H1, jnp.float32),       # (1, 128)
        "w2":  pad2(params["w2"], P_H1, P_H2, jnp.bfloat16),   # (128, 256) MXU operand
        "b2":  pad2(params["b2"], 1, P_H2, jnp.float32),       # (1, 256)
        "w3t": pad2(params["w3"].T, P_OUT_ROWS, P_H2, jnp.float32),  # (8, 256) VPU operand
        "b3":  params["b3"].astype(jnp.float32),                # (1, 3)
    }


def generator_forward(x, params, *, block_rows=2048):
    """x: [B, 3] float32 -> [B, 3] float32 (same semantics as Generator.forward)."""
    B = x.shape[0]
    # Sublane-aligned batch block; aim for >=2 grid blocks whenever B allows so
    # the "parallel" axis shards across both TensorCores on v7x.
    half = _round_up(max(1, pl.cdiv(B, 2)), 8)
    blk = max(8, min(block_rows, half))
    b_pad = _round_up(B, blk)
    if b_pad != B:
        x = jnp.pad(x, ((0, b_pad - B), (0, 0)))
    n_blocks = b_pad // blk

    kp = _pad_params(params)

    flops = 2 * b_pad * (D_IN * D_H1 + D_H1 * D_H2 + D_H2 * D_OUT)
    bytes_accessed = (
        b_pad * D_IN * 4 + b_pad * D_OUT * 4
        + kp["w1"].size * 4 + kp["b1"].size * 4
        + kp["w2"].size * 2 + kp["b2"].size * 4
        + kp["w3t"].size * 4 + kp["b3"].size * 4)

    out = pl.pallas_call(
        _mlp_kernel,
        out_shape=jax.ShapeDtypeStruct((b_pad, D_OUT), jnp.float32),
        grid_spec=pltpu.PrefetchScalarGridSpec(
            num_scalar_prefetch=0,
            grid=(n_blocks,),
            in_specs=[
                pl.BlockSpec((blk, D_IN), lambda i: (i, 0)),       # x: streamed per block
                pl.BlockSpec((P_IN, P_H1), lambda i: (0, 0)),      # w1: resident
                pl.BlockSpec((1, P_H1), lambda i: (0, 0)),         # b1
                pl.BlockSpec((P_H1, P_H2), lambda i: (0, 0)),      # w2
                pl.BlockSpec((1, P_H2), lambda i: (0, 0)),         # b2
                pl.BlockSpec((P_OUT_ROWS, P_H2), lambda i: (0, 0)),  # w3 (transposed)
                pl.BlockSpec((1, D_OUT), lambda i: (0, 0)),        # b3
            ],
            out_specs=pl.BlockSpec((blk, D_OUT), lambda i: (i, 0)),
        ),
        compiler_params=pltpu.CompilerParams(
            dimension_semantics=("parallel",),      # v7x: shard batch over 2 TCs
            # Actual footprint at blk=2048 is ~10-15 MiB (x/out blocks ~1 MiB x2
            # buffers each, h1/h2/layer-3 temps <= ~8 MiB, weights tiny); 32 MiB
            # gives headroom while staying well under v7x's 64 MiB physical VMEM.
            vmem_limit_bytes=32 * 1024 * 1024,
        ),
        cost_estimate=pl.CostEstimate(
            flops=flops, transcendentals=0, bytes_accessed=bytes_accessed),
    )(x, kp["w1"], kp["b1"], kp["w2"], kp["b2"], kp["w3t"], kp["b3"])

    return out[:B]


def init_params(key):
    """PyTorch nn.Linear default init: uniform +/- 1/sqrt(fan_in).

    Weights stored as (in_features, out_features); biases as (1, out_features).
    """
    dims = [(D_IN, D_H1), (D_H1, D_H2), (D_H2, D_OUT)]
    params = {}
    for i, (fan_in, fan_out) in enumerate(dims, start=1):
        key, kw, kb = jax.random.split(key, 3)
        bound = 1.0 / (fan_in ** 0.5)
        params[f"w{i}"] = jax.random.uniform(
            kw, (fan_in, fan_out), jnp.float32, minval=-bound, maxval=bound)
        params[f"b{i}"] = jax.random.uniform(
            kb, (1, fan_out), jnp.float32, minval=-bound, maxval=bound)
    return params


def _reference_forward(x, params):
    h1 = jnp.maximum(x @ params["w1"] + params["b1"], 0.0)
    h2 = jnp.maximum(h1 @ params["w2"] + params["b2"], 0.0)
    return h2 @ params["w3"] + params["b3"]


if __name__ == "__main__":
    key = jax.random.PRNGKey(0)
    key, kx = jax.random.split(key)
    B = 8
    x = jax.random.normal(kx, (B, D_IN), jnp.float32)

    params = init_params(key)

    out = jax.block_until_ready(generator_forward(x, params))

    ref = _reference_forward(x, params)
    assert out.shape == (B, D_OUT), out.shape
    # Layer 2 uses bf16 MXU inputs (f32 accumulation); layers 1/3 are full f32
    # -> modest tolerance.
    max_err = float(jnp.max(jnp.abs(out - ref)))
    assert jnp.allclose(out, ref, atol=3e-2, rtol=3e-2), f"mismatch, max_err={max_err}"

    print("KERNEL_OK")
</pallas_src>

<mosaic_0001>
module attributes {stable_mosaic.version = 11 : i64} {
  func.func @_mlp_kernel(%arg0: i32, %arg1: memref<8x3xf32, #tpu.memory_space<vmem>>, %arg2: memref<8x128xf32, #tpu.memory_space<vmem>>, %arg3: memref<1x128xf32, #tpu.memory_space<vmem>>, %arg4: memref<128x256xbf16, #tpu.memory_space<vmem>>, %arg5: memref<1x256xf32, #tpu.memory_space<vmem>>, %arg6: memref<8x256xf32, #tpu.memory_space<vmem>>, %arg7: memref<1x3xf32, #tpu.memory_space<vmem>>, %arg8: memref<8x3xf32, #tpu.memory_space<vmem>>) attributes {dimension_semantics = [#tpu.dimension_semantics<parallel>], iteration_bounds = array<i64: 1>, scalar_prefetch = 0 : i64, scratch_operands = 0 : i64, tpu.core_type = #tpu.core_type<tc>, window_params = [{transform_indices = @transform_0, window_bounds = array<i64: 8, 3>}, {pipeline_mode = #tpu.pipeline_mode<synchronous>, transform_indices = @transform_1, window_bounds = array<i64: 8, 128>}, {pipeline_mode = #tpu.pipeline_mode<synchronous>, transform_indices = @transform_2, window_bounds = array<i64: 1, 128>}, {pipeline_mode = #tpu.pipeline_mode<synchronous>, transform_indices = @transform_3, window_bounds = array<i64: 128, 256>}, {pipeline_mode = #tpu.pipeline_mode<synchronous>, transform_indices = @transform_4, window_bounds = array<i64: 1, 256>}, {pipeline_mode = #tpu.pipeline_mode<synchronous>, transform_indices = @transform_5, window_bounds = array<i64: 8, 256>}, {pipeline_mode = #tpu.pipeline_mode<synchronous>, transform_indices = @transform_6, window_bounds = array<i64: 1, 3>}, {transform_indices = @transform_7, window_bounds = array<i64: 8, 3>}]} {
    %c0 = arith.constant 0 : index
    %c0_0 = arith.constant 0 : index
    %0 = vector.load %arg1[%c0, %c0_0] : memref<8x3xf32, #tpu.memory_space<vmem>>, vector<8x3xf32>
    %c0_1 = arith.constant 0 : index
    %c0_2 = arith.constant 0 : index
    %1 = vector.load %arg2[%c0_1, %c0_2] : memref<8x128xf32, #tpu.memory_space<vmem>>, vector<8x128xf32>
    %2 = vector.extract_strided_slice %0 {offsets = [0, 0], sizes = [8, 1], strides = [1, 1]} : vector<8x3xf32> to vector<8x1xf32>
    %3 = vector.extract_strided_slice %1 {offsets = [0, 0], sizes = [1, 128], strides = [1, 1]} : vector<8x128xf32> to vector<1x128xf32>
    %4 = vector.broadcast %2 : vector<8x1xf32> to vector<8x128xf32>
    %5 = vector.broadcast %3 : vector<1x128xf32> to vector<8x128xf32>
    %6 = arith.mulf %4, %5 : vector<8x128xf32>
    %7 = vector.extract_strided_slice %0 {offsets = [0, 1], sizes = [8, 1], strides = [1, 1]} : vector<8x3xf32> to vector<8x1xf32>
    %8 = vector.extract_strided_slice %1 {offsets = [1, 0], sizes = [1, 128], strides = [1, 1]} : vector<8x128xf32> to vector<1x128xf32>
    %9 = vector.broadcast %7 : vector<8x1xf32> to vector<8x128xf32>
    %10 = vector.broadcast %8 : vector<1x128xf32> to vector<8x128xf32>
    %11 = arith.mulf %9, %10 : vector<8x128xf32>
    %12 = arith.addf %6, %11 : vector<8x128xf32>
    %13 = vector.extract_strided_slice %0 {offsets = [0, 2], sizes = [8, 1], strides = [1, 1]} : vector<8x3xf32> to vector<8x1xf32>
    %14 = vector.extract_strided_slice %1 {offsets = [2, 0], sizes = [1, 128], strides = [1, 1]} : vector<8x128xf32> to vector<1x128xf32>
    %15 = vector.broadcast %13 : vector<8x1xf32> to vector<8x128xf32>
    %16 = vector.broadcast %14 : vector<1x128xf32> to vector<8x128xf32>
    %17 = arith.mulf %15, %16 : vector<8x128xf32>
    %18 = arith.addf %12, %17 : vector<8x128xf32>
    %c0_3 = arith.constant 0 : index
    %c0_4 = arith.constant 0 : index
    %19 = vector.load %arg3[%c0_3, %c0_4] : memref<1x128xf32, #tpu.memory_space<vmem>>, vector<1x128xf32>
    %20 = vector.broadcast %19 : vector<1x128xf32> to vector<8x128xf32>
    %21 = arith.addf %18, %20 : vector<8x128xf32>
    %cst = arith.constant 0.000000e+00 : f32
    %22 = vector.broadcast %cst : f32 to vector<8x128xf32>
    %23 = arith.maximumf %21, %22 : vector<8x128xf32>
    %24 = arith.truncf %23 : vector<8x128xf32> to vector<8x128xbf16>
    %c0_5 = arith.constant 0 : index
    %c0_6 = arith.constant 0 : index
    %25 = vector.load %arg4[%c0_5, %c0_6] : memref<128x256xbf16, #tpu.memory_space<vmem>>, vector<128x256xbf16>
    %cst_7 = arith.constant dense<0.000000e+00> : vector<8x256xf32>
    %26 = tpu.matmul %24, %25, %cst_7 {dimension_numbers = #tpu.dot_dimension_numbers<[1], [0], [0], [1], [0, 0, 1, 1], [], []>} : vector<8x128xbf16>, vector<128x256xbf16>, vector<8x256xf32> -> vector<8x256xf32>
    %c0_8 = arith.constant 0 : index
    %c0_9 = arith.constant 0 : index
    %27 = vector.load %arg5[%c0_8, %c0_9] : memref<1x256xf32, #tpu.memory_space<vmem>>, vector<1x256xf32>
    %28 = vector.broadcast %27 : vector<1x256xf32> to vector<8x256xf32>
    %29 = arith.addf %26, %28 : vector<8x256xf32>
    %cst_10 = arith.constant 0.000000e+00 : f32
    %30 = vector.broadcast %cst_10 : f32 to vector<8x256xf32>
    %31 = arith.maximumf %29, %30 : vector<8x256xf32>
    %c0_11 = arith.constant 0 : index
    %c0_12 = arith.constant 0 : index
    %32 = vector.load %arg6[%c0_11, %c0_12] : memref<8x256xf32, #tpu.memory_space<vmem>>, vector<8x256xf32>
    %33 = vector.extract_strided_slice %32 {offsets = [0, 0], sizes = [1, 256], strides = [1, 1]} : vector<8x256xf32> to vector<1x256xf32>
    %34 = vector.broadcast %33 : vector<1x256xf32> to vector<8x256xf32>
    %35 = arith.mulf %31, %34 : vector<8x256xf32>
    %cst_13 = arith.constant dense<0.000000e+00> : vector<8xf32>
    %36 = vector.multi_reduction <add>, %35, %cst_13 [1] : vector<8x256xf32> to vector<8xf32>
    %37 = vector.shape_cast %36 : vector<8xf32> to vector<8x1xf32>
    %38 = vector.extract_strided_slice %32 {offsets = [1, 0], sizes = [1, 256], strides = [1, 1]} : vector<8x256xf32> to vector<1x256xf32>
    %39 = vector.broadcast %38 : vector<1x256xf32> to vector<8x256xf32>
    %40 = arith.mulf %31, %39 : vector<8x256xf32>
    %cst_14 = arith.constant dense<0.000000e+00> : vector<8xf32>
    %41 = vector.multi_reduction <add>, %40, %cst_14 [1] : vector<8x256xf32> to vector<8xf32>
    %42 = vector.shape_cast %41 : vector<8xf32> to vector<8x1xf32>
    %43 = vector.extract_strided_slice %32 {offsets = [2, 0], sizes = [1, 256], strides = [1, 1]} : vector<8x256xf32> to vector<1x256xf32>
    %44 = vector.broadcast %43 : vector<1x256xf32> to vector<8x256xf32>
    %45 = arith.mulf %31, %44 : vector<8x256xf32>
    %cst_15 = arith.constant dense<0.000000e+00> : vector<8xf32>
    %46 = vector.multi_reduction <add>, %45, %cst_15 [1] : vector<8x256xf32> to vector<8xf32>
    %47 = vector.shape_cast %46 : vector<8xf32> to vector<8x1xf32>
    %48 = tpu.concatenate %37, %42, %47 in 1 : vector<8x1xf32>, vector<8x1xf32>, vector<8x1xf32> -> vector<8x3xf32>
    %c0_16 = arith.constant 0 : index
    %c0_17 = arith.constant 0 : index
    %49 = vector.load %arg7[%c0_16, %c0_17] : memref<1x3xf32, #tpu.memory_space<vmem>>, vector<1x3xf32>
    %50 = vector.broadcast %49 : vector<1x3xf32> to vector<8x3xf32>
    %51 = arith.addf %48, %50 : vector<8x3xf32>
    %c0_18 = arith.constant 0 : index
    %c0_19 = arith.constant 0 : index
    %52 = vector.load %arg8[%c0_18, %c0_19] : memref<8x3xf32, #tpu.memory_space<vmem>>, vector<8x3xf32>
    tpu.vector_store %arg8[%c0_18, %c0_19], %51 {strides = array<i32>} : memref<8x3xf32, #tpu.memory_space<vmem>>, vector<8x3xf32>,
    return
  }
  func.func @transform_0(%arg0: i32) -> (i32, i32) {
    %c0_i32 = arith.constant 0 : i32
    %c0_i32_0 = arith.constant 0 : i32
    return %arg0, %c0_i32 : i32, i32
  }
  func.func @transform_1(%arg0: i32) -> (i32, i32) {
    %c0_i32 = arith.constant 0 : i32
    %c0_i32_0 = arith.constant 0 : i32
    %c0_i32_1 = arith.constant 0 : i32
    return %c0_i32, %c0_i32_0 : i32, i32
  }
  func.func @transform_2(%arg0: i32) -> (i32, i32) {
    %c0_i32 = arith.constant 0 : i32
    %c0_i32_0 = arith.constant 0 : i32
    %c0_i32_1 = arith.constant 0 : i32
    return %c0_i32, %c0_i32_0 : i32, i32
  }
  func.func @transform_3(%arg0: i32) -> (i32, i32) {
    %c0_i32 = arith.constant 0 : i32
    %c0_i32_0 = arith.constant 0 : i32
    %c0_i32_1 = arith.constant 0 : i32
    return %c0_i32, %c0_i32_0 : i32, i32
  }
  func.func @transform_4(%arg0: i32) -> (i32, i32) {
    %c0_i32 = arith.constant 0 : i32
    %c0_i32_0 = arith.constant 0 : i32
    %c0_i32_1 = arith.constant 0 : i32
    return %c0_i32, %c0_i32_0 : i32, i32
  }
  func.func @transform_5(%arg0: i32) -> (i32, i32) {
    %c0_i32 = arith.constant 0 : i32
    %c0_i32_0 = arith.constant 0 : i32
    %c0_i32_1 = arith.constant 0 : i32
    return %c0_i32, %c0_i32_0 : i32, i32
  }
  func.func @transform_6(%arg0: i32) -> (i32, i32) {
    %c0_i32 = arith.constant 0 : i32
    %c0_i32_0 = arith.constant 0 : i32
    %c0_i32_1 = arith.constant 0 : i32
    return %c0_i32, %c0_i32_0 : i32, i32
  }
  func.func @transform_7(%arg0: i32) -> (i32, i32) {
    %c0_i32 = arith.constant 0 : i32
    %c0_i32_0 = arith.constant 0 : i32
    return %arg0, %c0_i32 : i32, i32
  }
}

</mosaic_0001>

<llo_original>
// kernel: tpu_custom_call.1
$region0: #{tpu_custom_call.1}
  #allocation0 [shape = 'u32[]', space=smem, size = 0x4, offset = 0x4, fixed_abs, tag = 'smem constant byte address 0x4 - core index']
  #allocation1 [shape = 'u32[144,128]{1,0:T(1,128)}', space=vmem, size = 0x12000, scoped, tag = 'internal scratch']
  %s0 = inlined_call_operand.vmem [shape: f32[8,3], index: 0, kind: input, shape index: {}]
  %s1 = inlined_call_operand.vmem [shape: f32[8,128], index: 1, kind: input, shape index: {}]
  %s2 = inlined_call_operand.vmem [shape: f32[1,128], index: 2, kind: input, shape index: {}]
  %s3 = inlined_call_operand.hbm [shape: bf16[128,256], index: 3, kind: input, shape index: {}]
  %s4 = inlined_call_operand.vmem [shape: f32[1,256], index: 4, kind: input, shape index: {}]
  %s5 = inlined_call_operand.vmem [shape: f32[8,256], index: 5, kind: input, shape index: {}]
  %s6 = inlined_call_operand.vmem [shape: f32[1,3], index: 6, kind: input, shape index: {}]
  %s7 = inlined_call_operand.vmem [shape: f32[8,3], index: 7, kind: output, shape index: {}]
  %s8 = sld [smem:[#allocation0]]
  $region42: #{tpu_custom_call.1} parent=0
    _
  %s10 = ssub.s32 1, %s8
  %s11 = scalar_select 0, %s10, %s8
  $region1: #{tpu_custom_call.1} parent=0
    #allocation2 [shape = 'u8[65536]{0}', space=vmem, size = 0x10000, scoped, tag = 'input window, operand 3, single buffered']
    #allocation3 [shape = 's32[1]{0}', space=sflag, size = 0x4, scoped, tag = 'scoped memory for tpu_custom_call.1']
    %12 = vsyncpa [#allocation3], 0
    // Predicated region
    $region2: #{tpu_custom_call.1} parent=1 // pred_check
      _
    $region3: #{tpu_custom_call.1} parent=1 // pred_check_branch
      %14 = sbr.rel (0) target = $region5
    $region4: #{tpu_custom_call.1} parent=1 // pred_region
      _
    $region5: #{tpu_custom_call.1} parent=1 // pred_fallthru
      _
    // Predicated region
    $region6: #{tpu_custom_call.1} parent=1 // pred_check
      _
    $region7: #{tpu_custom_call.1} parent=1 // pred_check_branch
      %16 = sbr.rel (0) target = $region9
    $region8: #{tpu_custom_call.1} parent=1 // pred_region
      _
    $region9: #{tpu_custom_call.1} parent=1 // pred_fallthru
      _
    // Predicated region
    $region10: #{tpu_custom_call.1} parent=1 // pred_check
      _
    $region11: #{tpu_custom_call.1} parent=1 // pred_check_branch
      %18 = sbr.rel (0) target = $region13
    $region12: #{tpu_custom_call.1} parent=1 // pred_region
      _
    $region13: #{tpu_custom_call.1} parent=1 // pred_fallthru
      _
    // Predicated region
    $region14: #{tpu_custom_call.1} parent=1 // pred_check
      _
    $region15: #{tpu_custom_call.1} parent=1 // pred_check_branch
      %20 = sbr.rel (0) target = $region17
    $region16: #{tpu_custom_call.1} parent=1 // pred_region
      %s22 = ssub.s32 2048, 2048
      %23 = vsyncadd [#allocation3], %s22
      %s24 = sshll.u32 [#allocation2], 4
      %s25 = int_to_ptr.vmem [resolvable:$true] %s24
      %30 = dma.hbm_to_vmem [thread:$0]  %s3, 2048, %s25, [#allocation3], 128, 128, 8
    $region17: #{tpu_custom_call.1} parent=1 // pred_fallthru
      _
    // Predicated region
    $region18: #{tpu_custom_call.1} parent=1 // pred_check
      _
    $region19: #{tpu_custom_call.1} parent=1 // pred_check_branch
      %32 = sbr.rel (0) target = $region21
    $region20: #{tpu_custom_call.1} parent=1 // pred_region
      _
    $region21: #{tpu_custom_call.1} parent=1 // pred_fallthru
      _
    // Predicated region
    $region22: #{tpu_custom_call.1} parent=1 // pred_check
      _
    $region23: #{tpu_custom_call.1} parent=1 // pred_check_branch
      %34 = sbr.rel (0) target = $region25
    $region24: #{tpu_custom_call.1} parent=1 // pred_region
      _
    $region25: #{tpu_custom_call.1} parent=1 // pred_fallthru
      _
    // Predicated region
    $region26: #{tpu_custom_call.1} parent=1 // pred_check
      _
    $region27: #{tpu_custom_call.1} parent=1 // pred_check_branch
      %36 = sbr.rel (0) target = $region29
    $region28: #{tpu_custom_call.1} parent=1 // pred_region
      _
    $region29: #{tpu_custom_call.1} parent=1 // pred_fallthru
      _
    // Predicated region
    $region30: #{tpu_custom_call.1} parent=1 // pred_check
      _
    $region31: #{tpu_custom_call.1} parent=1 // pred_check_branch
      %38 = sbr.rel (0) target = $region33
    $region32: #{tpu_custom_call.1} parent=1 // pred_region
      %39 = dma.done [#allocation3], 2048
    $region33: #{tpu_custom_call.1} parent=1 // pred_fallthru
      _
    %v41 = vld [vmem:[%s0] sm:$0xff]
    %v42 = vld [vmem:[%s1] sm:$0xff]
    %44 = vset.pattern.permute.xlu0 0
    %45 = vperm.xlu0 %44, %v41
    %v46 = vpop.permute.xlu0 %45
    %v48 = vlaneseq
    %v49 = vshrl.u32 %v48, 7
    %v50 = vsub.s32 0, %v49
    %v51 = vrot.slane %v42, %v50
    %v52 = vmul.f32 %v46, %v51
    %53 = vset.pattern.permute.xlu0 1
    %54 = vperm.xlu0 %53, %v41
    %v55 = vpop.permute.xlu0 %54
    %v57 = vlaneseq
    %v58 = vshrl.u32 %v57, 7
    %v59 = vsub.s32 1, %v58
    %v60 = vrot.slane %v42, %v59
    %v61 = vmul.f32 %v55, %v60
    %v62 = vadd.f32 %v52, %v61
    %63 = vset.pattern.permute.xlu0 2
    %64 = vperm.xlu0 %63, %v41
    %v65 = vpop.permute.xlu0 %64
    %v67 = vlaneseq
    %v68 = vshrl.u32 %v67, 7
    %v69 = vsub.s32 2, %v68
    %v70 = vrot.slane %v42, %v69
    %v71 = vmul.f32 %v65, %v70
    %v72 = vadd.f32 %v62, %v71
    %v73 = vld [vmem:[%s2] sm:$0x1]
    %v75 = vlaneseq
    %v76 = vshrl.u32 %v75, 7
    %v77 = vsub.s32 0, %v76
    %v78 = vrot.slane %v73, %v77
    %v80 = vadd.f32 %v72, %v78
    %v81 = vmax.f32 %v80, 0.0
    %v82 = vpack.c.bf16 %v81, %v81
    %v83 = vld [vmem:[#allocation2] sm:$0xff]
    %v84 = vld [vmem:[#allocation2 + $0x8] sm:$0xff]
    %v85 = vld [vmem:[#allocation2 + $0x10] sm:$0xff]
    %v86 = vld [vmem:[#allocation2 + $0x18] sm:$0xff]
    %v87 = vld [vmem:[#allocation2 + $0x20] sm:$0xff]
    %v88 = vld [vmem:[#allocation2 + $0x28] sm:$0xff]
    %v89 = vld [vmem:[#allocation2 + $0x30] sm:$0xff]
    %v90 = vld [vmem:[#allocation2 + $0x38] sm:$0xff]
    %v91 = vld [vmem:[#allocation2 + $0x40] sm:$0xff]
    %v92 = vld [vmem:[#allocation2 + $0x48] sm:$0xff]
    %v93 = vld [vmem:[#allocation2 + $0x50] sm:$0xff]
    %v94 = vld [vmem:[#allocation2 + $0x58] sm:$0xff]
    %v95 = vld [vmem:[#allocation2 + $0x60] sm:$0xff]
    %v96 = vld [vmem:[#allocation2 + $0x68] sm:$0xff]
    %v97 = vld [vmem:[#allocation2 + $0x70] sm:$0xff]
    %v98 = vld [vmem:[#allocation2 + $0x78] sm:$0xff]
    %v99 = vld [vmem:[%s4] sm:$0x3]
    %v101 = vlaneseq
    %v102 = vshrl.u32 %v101, 7
    %v103 = vsub.s32 0, %v102
    %v104 = vrot.slane %v99, %v103
    %v105 = vlaneseq
    %v106 = vshrl.u32 %v105, 7
    %v107 = vsub.s32 1, %v106
    %v108 = vrot.slane %v99, %v107
    %v127 = vunpack.c.l.b16 %v83
    %v128 = vunpack.c.h.b16 %v83
    %v129 = vunpack.c.l.b16 %v84
    %v130 = vunpack.c.h.b16 %v84
    %v131 = vunpack.c.l.b16 %v85
    %v132 = vunpack.c.h.b16 %v85
    %v133 = vunpack.c.l.b16 %v86
    %v134 = vunpack.c.h.b16 %v86
    %v135 = vunpack.c.l.b16 %v87
    %v136 = vunpack.c.h.b16 %v87
    %v137 = vunpack.c.l.b16 %v88
    %v138 = vunpack.c.h.b16 %v88
    %v139 = vunpack.c.l.b16 %v89
    %v140 = vunpack.c.h.b16 %v89
    %v141 = vunpack.c.l.b16 %v90
    %v142 = vunpack.c.h.b16 %v90
    %v143 = vunpack.c.l.b16 %v91
    %v144 = vunpack.c.h.b16 %v91
    %v145 = vunpack.c.l.b16 %v92
    %v146 = vunpack.c.h.b16 %v92
    %v147 = vunpack.c.l.b16 %v93
    %v148 = vunpack.c.h.b16 %v93
    %v149 = vunpack.c.l.b16 %v94
    %v150 = vunpack.c.h.b16 %v94
    %v151 = vunpack.c.l.b16 %v95
    %v152 = vunpack.c.h.b16 %v95
    %v153 = vunpack.c.l.b16 %v96
    %v154 = vunpack.c.h.b16 %v96
    %v155 = vunpack.c.l.b16 %v97
    %v156 = vunpack.c.h.b16 %v97
    %v157 = vunpack.c.l.b16 %v98
    %v158 = vunpack.c.h.b16 %v98
    %v159 = vpack.c.b16 %v129, %v127
    %v160 = vpack.c.b16 %v130, %v128
    %v161 = vpack.c.b16 %v133, %v131
    %v162 = vpack.c.b16 %v134, %v132
    %v163 = vpack.c.b16 %v137, %v135
    %v164 = vpack.c.b16 %v138, %v136
    %v165 = vpack.c.b16 %v141, %v139
    %v166 = vpack.c.b16 %v142, %v140
    %v167 = vpack.c.b16 %v145, %v143
    %v168 = vpack.c.b16 %v146, %v144
    %v169 = vpack.c.b16 %v149, %v147
    %v170 = vpack.c.b16 %v150, %v148
    %v171 = vpack.c.b16 %v153, %v151
    %v172 = vpack.c.b16 %v154, %v152
    %v173 = vpack.c.b16 %v157, %v155
    %v174 = vpack.c.b16 %v158, %v156
    %191 = vmatprep.subr.bf16.mxu0 %v160
    %192 = vmatpush1.bf16.msra.mxu0 %v159
    %193 = vmatprep.subr.bf16.mxu0 %v162
    %194 = vmatpush1.bf16.msra.mxu0 %v161
    %195 = vmatprep.subr.bf16.mxu0 %v164
    %196 = vmatpush1.bf16.msra.mxu0 %v163
    %197 = vmatprep.subr.bf16.mxu0 %v166
    %198 = vmatpush1.bf16.msra.mxu0 %v165
    %199 = vmatprep.subr.bf16.mxu0 %v168
    %200 = vmatpush1.bf16.msra.mxu0 %v167
    %201 = vmatprep.subr.bf16.mxu0 %v170
    %202 = vmatpush1.bf16.msra.mxu0 %v169
    %203 = vmatprep.subr.bf16.mxu0 %v172
    %204 = vmatpush1.bf16.msra.mxu0 %v171
    %205 = vmatprep.subr.bf16.mxu0 %v174
    %206 = vmatpush1.bf16.msra.mxu0 %v173
    %207 = vmatprep.subr.bf16.mxu0 0
    %208 = vmatpush1.bf16.msra.mxu0 0
    %209 = vmatprep.subr.bf16.mxu0 0
    %210 = vmatpush1.bf16.msra.mxu0 0
    %211 = vmatprep.subr.bf16.mxu0 0
    %212 = vmatpush1.bf16.msra.mxu0 0
    %213 = vmatprep.subr.bf16.mxu0 0
    %214 = vmatpush1.bf16.msra.mxu0 0
    %215 = vmatprep.subr.bf16.mxu0 0
    %216 = vmatpush1.bf16.msra.mxu0 0
    %217 = vmatprep.subr.bf16.mxu0 0
    %218 = vmatpush1.bf16.msra.mxu0 0
    %219 = vmatprep.subr.bf16.mxu0 0
    %220 = vmatpush1.bf16.msra.mxu0 0
    %221 = vmatprep.subr.bf16.mxu0 0
    %222 = vmatpush1.bf16.msra.mxu0 0
    %223 = vmatprep.mubr.bf16.mxu0 0
    %224 = vmatmul.mubr.bf16.gmra.mrb[0].mxu0 %v82
    %v225 = vpop.f32.mrb[0].mxu0
    %v226 = vadd.f32 %v104, %v225
    %v227 = vpop.f32.mrb[0].mxu0
    %v228 = vadd.f32 %v108, %v227
    %v229 = vpop.f32.mrb[0].mxu0
    %v230 = vpop.f32.mrb[0].mxu0
    %231 = vdwg.mxu0
    %v232 = vmax.f32 %v226, 0.0
    %v233 = vmax.f32 %v228, 0.0
    %v234 = vld [vmem:[%s5] sm:$0xff]
    %v235 = vld [vmem:[%s5 + $0x8] sm:$0xff]
    %v236 = vlaneseq
    %v237 = vshrl.u32 %v236, 7
    %v238 = vsub.s32 0, %v237
    %v239 = vrot.slane %v234, %v238
    %v240 = vlaneseq
    %v241 = vshrl.u32 %v240, 7
    %v242 = vsub.s32 0, %v241
    %v243 = vrot.slane %v235, %v242
    %v244 = vmul.f32 %v232, %v239
    %v245 = vmul.f32 %v233, %v243
    %v246 = vadd.f32 %v244, %v245
    %247 = vadd.xlane.f32.xlu0 %v246
    %v248 = vpop.xlane.xlu0 %247
    %v249 = vlaneseq
    %v250 = vshrl.u32 %v249, 7
    %v251 = vsub.s32 1, %v250
    %v252 = vrot.slane %v234, %v251
    %v253 = vlaneseq
    %v254 = vshrl.u32 %v253, 7
    %v255 = vsub.s32 1, %v254
    %v256 = vrot.slane %v235, %v255
    %v257 = vmul.f32 %v232, %v252
    %v258 = vmul.f32 %v233, %v256
    %v259 = vadd.f32 %v257, %v258
    %260 = vadd.xlane.f32.xlu0 %v259
    %v261 = vpop.xlane.xlu0 %260
    %v262 = vlaneseq
    %v263 = vshrl.u32 %v262, 7
    %v264 = vsub.s32 2, %v263
    %v265 = vrot.slane %v234, %v264
    %v266 = vlaneseq
    %v267 = vshrl.u32 %v266, 7
    %v268 = vsub.s32 2, %v267
    %v269 = vrot.slane %v235, %v268
    %v270 = vmul.f32 %v232, %v265
    %v271 = vmul.f32 %v233, %v269
    %v272 = vadd.f32 %v270, %v271
    %273 = vadd.xlane.f32.xlu0 %v272
    %v274 = vpop.xlane.xlu0 %273
    %vm275 = vcmask 7168
    %v276 = vsel %vm275, %v248, %v261
    %vm277 = vcmask 15360
    %v278 = vsel %vm277, %v276, %v274
    %v279 = vld [vmem:[%s6] sm:$0x1]
    %v281 = vlaneseq
    %v282 = vshrl.u32 %v281, 7
    %v283 = vsub.s32 0, %v282
    %v284 = vrot.slane %v279, %v283
    %v286 = vadd.f32 %v278, %v284
    %vm287 = vcmask 23552
    %288 = vst.msk [vmem:[%s7] sm:$0xff] %vm287, %v286
    // Predicated region
    $region34: #{tpu_custom_call.1} parent=1 // pred_check
      _
    $region35: #{tpu_custom_call.1} parent=1 // pred_check_branch
      %290 = sbr.rel (0) target = $region37
    $region36: #{tpu_custom_call.1} parent=1 // pred_region
      _
    $region37: #{tpu_custom_call.1} parent=1 // pred_fallthru
      _
    // Predicated region
    $region38: #{tpu_custom_call.1} parent=1 // pred_check
      _
    $region39: #{tpu_custom_call.1} parent=1 // pred_check_branch
      %292 = sbr.rel (0) target = $region41
    $region40: #{tpu_custom_call.1} parent=1 // pred_region
      _
    $region41: #{tpu_custom_call.1} parent=1 // pred_fallthru
      _
    %293 = vsyncpa [#allocation3], 1

</llo_original>
